<compile_context>
chip_gen: v7x
topology: tpu7x:2x2x1
jax: 0.10.0
libtpu: 0.0.40
codegen_flags: <defaults>
</compile_context>

<pallas_src>
import jax
import jax.numpy as jnp
from jax.experimental import pallas as pl
from jax.experimental.pallas import tpu as pltpu

# ---------------- scaled-down hyper-parameters (consistent with __init__) ----
CAMERAS = ("cam_left", "cam_right")
NUM_CAMS = len(CAMERAS)
NUM_ENCODE_FRAMES = 3                      # num_encode_frames
BS = 2                                     # batch size
IMG_C, IMG_H, IMG_W = 3, 16, 16
CIN_PAD = 8                                # pad 3 input channels -> 8 (zero weights on pad)
CAM_DIM = 8                                # cam_dim (camera encoder output channels)
FEAT_H, FEAT_W = IMG_H // 2, IMG_W // 2    # stride-2 1x1-conv encoder output
DIM = 16                                   # dim (coarse BEV channels)
HR_DIM = 4                                 # hr_dim
GRID_SHAPE = (8, 8, 4)                     # grid_shape (X, Y, Z)
Z = GRID_SHAPE[2]
SCALE = 3.0                                # scale: only Grid3d metadata, no compute
NCF = NUM_CAMS * NUM_ENCODE_FRAMES         # cams x frames = 6
P = BS * FEAT_H * FEAT_W                   # pixels per slice = 128 (lane axis)
OUT_CH = DIM + HR_DIM * Z                  # fused backbone output channels = 32
ROWS_PER_CAM = NUM_ENCODE_FRAMES * CAM_DIM  # encoder-feature rows per camera = 24


def _vmem():
    return pl.BlockSpec(memory_space=pltpu.MemorySpace.VMEM)


# ---------------- fused kernel: encoder + mask + backbone + losses -----------
def _bev_fused_kernel(x_ref, we_ref, be_ref, mask_ref, mv_ref, wb_ref, bb_ref,
                      loss_ref):
    # x:    [NCF*CIN_PAD, P]  bf16  channels-on-sublanes, pixels-on-lanes input
    # we:   [NCF*CAM_DIM, NCF*CIN_PAD] bf16  block-diagonal 1x1-conv weight
    # be:   [NCF*CAM_DIM, 1]  f32   encoder bias (tiled over cams/frames)
    # mask: [NUM_CAMS, P]     f32   1.0 = keep encoder feature, 0.0 = replace
    # mv:   [ROWS_PER_CAM, 1] f32   cam_mask_value (tiled over frames)
    # wb:   [OUT_CH, NCF*CAM_DIM] bf16  backbone weight (mean over NCF folded, /NCF)
    # bb:   [OUT_CH, 1]       f32   backbone bias (coarse ++ hr)
    # loss: [1, 2] SMEM       (bev mse, hr mse)

    # camera encoders: per-(cam,frame) stride-2 1x1 conv + ReLU (one bf16 MXU matmul)
    feats = jnp.dot(we_ref[...], x_ref[...],
                    preferred_element_type=jnp.float32)       # [NCF*CAM_DIM, P] f32
    feats = jnp.maximum(feats + be_ref[...], 0.0)

    # block masking: per-camera mask (shared across frames & batch, as in the
    # reference); one vselect per camera row-block.
    mv = mv_ref[...]                                          # [ROWS_PER_CAM, 1]
    blocks = []
    for c in range(NUM_CAMS):
        blk = feats[c * ROWS_PER_CAM:(c + 1) * ROWS_PER_CAM, :]
        keep = mask_ref[c:c + 1, :] > 0.0                     # [1, P]
        blocks.append(jnp.where(keep, blk, mv))
    feats = jnp.concatenate(blocks, axis=0)                   # [NCF*CAM_DIM, P]

    # backbone: mean over cams/frames folded into K (wb pre-scaled by 1/NCF),
    # coarse + HR heads fused into one bf16 MXU matmul, f32 accumulate.
    y = jnp.dot(wb_ref[...], feats.astype(jnp.bfloat16),
                preferred_element_type=jnp.float32)           # [OUT_CH, P] f32
    y = jnp.maximum(y + bb_ref[...], 0.0)

    # tasks / hr_tasks: loss = mean(grid ** 2); ONE lane reduction over [OUT_CH,P],
    # then two tiny sublane sums.
    s = jnp.sum(y * y, axis=-1, keepdims=True)                # [OUT_CH, 1]
    loss_ref[0, 0] = jnp.sum(s[:DIM, :]) * (1.0 / float(DIM * P))
    loss_ref[0, 1] = jnp.sum(s[DIM:, :]) * (1.0 / float(HR_DIM * Z * P))


def _run_fused(x, we, be, mask, mv, wb, bb):
    return pl.pallas_call(
        _bev_fused_kernel,
        out_shape=jax.ShapeDtypeStruct((1, 2), jnp.float32),
        in_specs=[_vmem()] * 7,
        out_specs=pl.BlockSpec(memory_space=pltpu.MemorySpace.SMEM),
        compiler_params=pltpu.CompilerParams(
            # let XLA fuse the stride-2 subsample / transpose / pad / reshape /
            # bf16-cast chain directly into the kernel's x operand
            allow_input_fusion=[True] + [False] * 6),
    )(x, we, be, mask, mv, wb, bb)


# ---------------- parameters & one-time packing (hoisted out of the step) ----
def init_params(key):
    ks = jax.random.split(key, 5)
    enc_w = jax.random.normal(ks[0], (CIN_PAD, CAM_DIM), jnp.float32) * 0.1
    enc_w = enc_w.at[IMG_C:, :].set(0.0)          # padded input channels inert
    enc_b = jax.random.normal(ks[1], (CAM_DIM,), jnp.float32) * 0.1
    cam_mask_value = jax.random.normal(ks[2], (CAM_DIM,), jnp.float32)  # Embedding(1, cam_dim)
    bev_w = jax.random.normal(ks[3], (CAM_DIM, DIM), jnp.float32) * 0.1
    hr_w = jax.random.normal(ks[4], (CAM_DIM, HR_DIM * Z), jnp.float32) * 0.1
    bev_b = jnp.zeros((DIM,), jnp.float32)
    hr_b = jnp.zeros((HR_DIM * Z,), jnp.float32)
    return dict(enc_w=enc_w, enc_b=enc_b, cam_mask_value=cam_mask_value,
                bev_w=bev_w, bev_b=bev_b, hr_w=hr_w, hr_b=hr_b)


def pack_params(params):
    # Called ONCE at setup (not inside the per-step jit): packs the weights
    # into lane-dense, fused, bf16 kernel operands.
    w_t = params["enc_w"].T                                            # [CAM_DIM, CIN_PAD]
    we = jnp.kron(jnp.eye(NCF, dtype=jnp.float32), w_t)                # [48, 48] block-diag
    be = jnp.tile(params["enc_b"][:, None], (NCF, 1))                  # [48, 1]
    mv = jnp.tile(params["cam_mask_value"][:, None],
                  (NUM_ENCODE_FRAMES, 1))                              # [24, 1] (per-cam block)
    w_cat = jnp.concatenate([params["bev_w"], params["hr_w"]], axis=1)  # [CAM_DIM, 32]
    wb = jnp.tile(w_cat.T / float(NCF), (1, NCF))                      # [32, 48] (mean folded)
    bb = jnp.concatenate([params["bev_b"], params["hr_b"]])[:, None]   # [32, 1]
    return (we.astype(jnp.bfloat16), be, mv,
            wb.astype(jnp.bfloat16), bb)


# ---------------- block mask (per camera, built outside the jitted step) -----
def random_block_mask(key, h, w, block_size=(3, 3), num_blocks=2):
    # TODO(synk): original uses block_size=(25,25), num_blocks=8 at full feature
    # resolution; scaled down here.
    rows = jnp.arange(h)[:, None]
    cols = jnp.arange(w)[None, :]
    mask = jnp.ones((h, w), dtype=bool)
    for k in jax.random.split(key, num_blocks):
        kr, kc = jax.random.split(k)
        r = jax.random.randint(kr, (), 0, h - block_size[0] + 1)   # block fully inside
        c = jax.random.randint(kc, (), 0, w - block_size[1] + 1)
        blk = (rows >= r) & (rows < r + block_size[0]) & \
              (cols >= c) & (cols < c + block_size[1])
        mask = mask & (~blk)
    return mask  # True = keep encoder feature, False = replace with cam_mask_value


def build_block_masks(key):
    # One mask per camera, shared across frames and batch (as in the reference),
    # pre-broadcast to the lane-dense [NUM_CAMS, P] layout the kernel expects.
    masks = []
    for k in jax.random.split(key, NUM_CAMS):
        m = random_block_mask(k, FEAT_H, FEAT_W)
        m = jnp.broadcast_to(m[None].astype(jnp.float32),
                             (BS, FEAT_H, FEAT_W)).reshape(P)
        masks.append(m)
    return jnp.stack(masks)                                    # [NUM_CAMS, P]


# ---------------- per-step forward (jitted) -----------------------------------
@jax.jit
def bev_task_van_forward(images, mask, we, be, mv, wb, bb):
    # images: [num_cams, num_frames, BS, C, H, W]  (NCHW, PyTorch convention)
    # Stride-2 subsample + channels-on-sublanes / pixels-on-lanes layout; this
    # producer chain is fused into the kernel input via allow_input_fusion.
    # TODO(synk): at production resolution do the strided read inside the kernel
    # from an ANY/HBM ref with manual DMA instead.
    x = images[:, :, :, :, ::2, ::2]                        # [NC, NF, BS, C, FH, FW]
    x = jnp.transpose(x, (0, 1, 3, 2, 4, 5))                # [NC, NF, C, BS, FH, FW]
    x = x.reshape(NCF, IMG_C, P)
    x = jnp.pad(x, ((0, 0), (0, CIN_PAD - IMG_C), (0, 0)))  # pad channels 3->8
    x = x.reshape(NCF * CIN_PAD, P).astype(jnp.bfloat16)    # [48, 128] bf16

    losses_vec = _run_fused(x, we, be, mask, mv, wb, bb)    # [1, 2]

    # tasks (coarse) and hr_tasks (fine): losses dict, keyed "<task>-<loss>"
    return {
        "bev_task-mse": losses_vec[0, 0],
        "hr_task-mse": losses_vec[0, 1],
    }


if __name__ == "__main__":
    key = jax.random.PRNGKey(0)
    k_img, k_param, k_mask = jax.random.split(key, 3)
    images = jax.random.normal(
        k_img, (NUM_CAMS, NUM_ENCODE_FRAMES, BS, IMG_C, IMG_H, IMG_W),
        jnp.float32)

    params = init_params(k_param)
    we, be, mv, wb, bb = pack_params(params)      # hoisted: packed once, reused every step
    mask = build_block_masks(k_mask)              # per-step random mask, built outside the jit

    losses = bev_task_van_forward(images, mask, we, be, mv, wb, bb)
    losses = jax.tree_util.tree_map(jax.block_until_ready, losses)
    for name in sorted(losses):
        assert jnp.isfinite(losses[name]).item(), name
    print("KERNEL_OK")
</pallas_src>

<mosaic_0001>
module attributes {stable_mosaic.version = 11 : i64} {
  func.func @_bev_fused_kernel(%arg0: memref<48x128xbf16, #tpu.memory_space<vmem>>, %arg1: memref<48x48xbf16, #tpu.memory_space<vmem>>, %arg2: memref<48x1xf32, #tpu.memory_space<vmem>>, %arg3: memref<2x128xf32, #tpu.memory_space<vmem>>, %arg4: memref<24x1xf32, #tpu.memory_space<vmem>>, %arg5: memref<32x48xbf16, #tpu.memory_space<vmem>>, %arg6: memref<32x1xf32, #tpu.memory_space<vmem>>, %arg7: memref<1x2xf32, #tpu.memory_space<smem>>) attributes {dimension_semantics = [], scalar_prefetch = 0 : i64, scratch_operands = 0 : i64, tpu.core_type = #tpu.core_type<tc>} {
    %c0 = arith.constant 0 : index
    %c0_0 = arith.constant 0 : index
    %0 = vector.load %arg1[%c0, %c0_0] : memref<48x48xbf16, #tpu.memory_space<vmem>>, vector<48x48xbf16>
    %c0_1 = arith.constant 0 : index
    %c0_2 = arith.constant 0 : index
    %1 = vector.load %arg0[%c0_1, %c0_2] : memref<48x128xbf16, #tpu.memory_space<vmem>>, vector<48x128xbf16>
    %cst = arith.constant dense<0.000000e+00> : vector<48x128xf32>
    %2 = tpu.matmul %0, %1, %cst {dimension_numbers = #tpu.dot_dimension_numbers<[1], [0], [0], [1], [0, 0, 1, 1], [], []>} : vector<48x48xbf16>, vector<48x128xbf16>, vector<48x128xf32> -> vector<48x128xf32>
    %c0_3 = arith.constant 0 : index
    %c0_4 = arith.constant 0 : index
    %3 = vector.load %arg2[%c0_3, %c0_4] : memref<48x1xf32, #tpu.memory_space<vmem>>, vector<48x1xf32>
    %4 = vector.broadcast %3 : vector<48x1xf32> to vector<48x128xf32>
    %5 = arith.addf %2, %4 : vector<48x128xf32>
    %cst_5 = arith.constant 0.000000e+00 : f32
    %6 = vector.broadcast %cst_5 : f32 to vector<48x128xf32>
    %7 = arith.maximumf %5, %6 : vector<48x128xf32>
    %c0_6 = arith.constant 0 : index
    %c0_7 = arith.constant 0 : index
    %8 = vector.load %arg4[%c0_6, %c0_7] : memref<24x1xf32, #tpu.memory_space<vmem>>, vector<24x1xf32>
    %9 = vector.extract_strided_slice %7 {offsets = [0, 0], sizes = [24, 128], strides = [1, 1]} : vector<48x128xf32> to vector<24x128xf32>
    %c0_8 = arith.constant 0 : index
    %c0_9 = arith.constant 0 : index
    %10 = vector.load %arg3[%c0_8, %c0_9] : memref<2x128xf32, #tpu.memory_space<vmem>>, vector<1x128xf32>
    %cst_10 = arith.constant 0.000000e+00 : f32
    %11 = vector.broadcast %cst_10 : f32 to vector<1x128xf32>
    %12 = arith.cmpf ogt, %10, %11 : vector<1x128xf32>
    %13 = vector.shape_cast %12 : vector<1x128xi1> to vector<1x128xi1>
    %14 = vector.broadcast %13 : vector<1x128xi1> to vector<24x128xi1>
    %15 = vector.shape_cast %8 : vector<24x1xf32> to vector<24x1xf32>
    %16 = vector.broadcast %15 : vector<24x1xf32> to vector<24x128xf32>
    %17 = arith.select %14, %9, %16 : vector<24x128xi1>, vector<24x128xf32>
    %18 = vector.extract_strided_slice %7 {offsets = [24, 0], sizes = [24, 128], strides = [1, 1]} : vector<48x128xf32> to vector<24x128xf32>
    %c1 = arith.constant 1 : index
    %c0_11 = arith.constant 0 : index
    %19 = vector.load %arg3[%c1, %c0_11] : memref<2x128xf32, #tpu.memory_space<vmem>>, vector<1x128xf32>
    %cst_12 = arith.constant 0.000000e+00 : f32
    %20 = vector.broadcast %cst_12 : f32 to vector<1x128xf32>
    %21 = arith.cmpf ogt, %19, %20 : vector<1x128xf32>
    %22 = vector.shape_cast %21 : vector<1x128xi1> to vector<1x128xi1>
    %23 = vector.broadcast %22 : vector<1x128xi1> to vector<24x128xi1>
    %24 = vector.shape_cast %8 : vector<24x1xf32> to vector<24x1xf32>
    %25 = vector.broadcast %24 : vector<24x1xf32> to vector<24x128xf32>
    %26 = arith.select %23, %18, %25 : vector<24x128xi1>, vector<24x128xf32>
    %27 = tpu.concatenate %17, %26 in 0 : vector<24x128xf32>, vector<24x128xf32> -> vector<48x128xf32>
    %c0_13 = arith.constant 0 : index
    %c0_14 = arith.constant 0 : index
    %28 = vector.load %arg5[%c0_13, %c0_14] : memref<32x48xbf16, #tpu.memory_space<vmem>>, vector<32x48xbf16>
    %29 = arith.truncf %27 : vector<48x128xf32> to vector<48x128xbf16>
    %cst_15 = arith.constant dense<0.000000e+00> : vector<32x128xf32>
    %30 = tpu.matmul %28, %29, %cst_15 {dimension_numbers = #tpu.dot_dimension_numbers<[1], [0], [0], [1], [0, 0, 1, 1], [], []>} : vector<32x48xbf16>, vector<48x128xbf16>, vector<32x128xf32> -> vector<32x128xf32>
    %c0_16 = arith.constant 0 : index
    %c0_17 = arith.constant 0 : index
    %31 = vector.load %arg6[%c0_16, %c0_17] : memref<32x1xf32, #tpu.memory_space<vmem>>, vector<32x1xf32>
    %32 = vector.broadcast %31 : vector<32x1xf32> to vector<32x128xf32>
    %33 = arith.addf %30, %32 : vector<32x128xf32>
    %cst_18 = arith.constant 0.000000e+00 : f32
    %34 = vector.broadcast %cst_18 : f32 to vector<32x128xf32>
    %35 = arith.maximumf %33, %34 : vector<32x128xf32>
    %36 = arith.mulf %35, %35 : vector<32x128xf32>
    %cst_19 = arith.constant dense<0.000000e+00> : vector<32xf32>
    %37 = vector.multi_reduction <add>, %36, %cst_19 [1] : vector<32x128xf32> to vector<32xf32>
    %38 = vector.shape_cast %37 : vector<32xf32> to vector<32x1xf32>
    %39 = vector.extract_strided_slice %38 {offsets = [0, 0], sizes = [16, 1], strides = [1, 1]} : vector<32x1xf32> to vector<16x1xf32>
    %40 = vector.shape_cast %39 : vector<16x1xf32> to vector<1x16x1xf32>
    %cst_20 = arith.constant dense<0.000000e+00> : vector<1xf32>
    %41 = vector.multi_reduction <add>, %40, %cst_20 [1, 2] : vector<1x16x1xf32> to vector<1xf32>
    %42 = vector.shape_cast %41 : vector<1xf32> to vector<1x1x1xf32>
    %43 = vector.extract %42[0, 0, 0] : f32 from vector<1x1x1xf32>
    %cst_21 = arith.constant 4.8828125E-4 : f32
    %44 = arith.mulf %43, %cst_21 : f32
    %c0_22 = arith.constant 0 : index
    %c0_23 = arith.constant 0 : index
    %45 = memref.load %arg7[%c0_22, %c0_23] : memref<1x2xf32, #tpu.memory_space<smem>>
    memref.store %44, %arg7[%c0_22, %c0_23] : memref<1x2xf32, #tpu.memory_space<smem>>
    %46 = vector.extract_strided_slice %38 {offsets = [16, 0], sizes = [16, 1], strides = [1, 1]} : vector<32x1xf32> to vector<16x1xf32>
    %47 = vector.shape_cast %46 : vector<16x1xf32> to vector<1x16x1xf32>
    %cst_24 = arith.constant dense<0.000000e+00> : vector<1xf32>
    %48 = vector.multi_reduction <add>, %47, %cst_24 [1, 2] : vector<1x16x1xf32> to vector<1xf32>
    %49 = vector.shape_cast %48 : vector<1xf32> to vector<1x1x1xf32>
    %50 = vector.extract %49[0, 0, 0] : f32 from vector<1x1x1xf32>
    %cst_25 = arith.constant 4.8828125E-4 : f32
    %51 = arith.mulf %50, %cst_25 : f32
    %c0_26 = arith.constant 0 : index
    %c1_27 = arith.constant 1 : index
    %52 = memref.load %arg7[%c0_26, %c1_27] : memref<1x2xf32, #tpu.memory_space<smem>>
    memref.store %51, %arg7[%c0_26, %c1_27] : memref<1x2xf32, #tpu.memory_space<smem>>
    return
  }
}

</mosaic_0001>

<llo_original>
// kernel: bev_task_van_forward.2
$region0: #{bev_task_van_forward.2}
  #allocation0 [shape = 'u32[]', space=smem, size = 0x4, offset = 0x4, fixed_abs, tag = 'smem constant byte address 0x4 - core index']
  #allocation1 [shape = 'u32[144,128]{1,0:T(1,128)}', space=vmem, size = 0x12000, scoped, tag = 'internal scratch']
  #allocation2 [shape = 'u32[2048]{0}', space=vmem, size = 0x2000, scoped, tag = 'scoped memory for bev_task_van_forward.2']
  #allocation3 [shape = 'u32[2048]{0}', space=vmem, size = 0x2000, scoped, tag = 'scoped memory for bev_task_van_forward.2']
  #allocation4 [shape = 'u32[2048]{0}', space=vmem, size = 0x2000, scoped, tag = 'scoped memory for bev_task_van_forward.2']
  #allocation5 [shape = 'u32[2048]{0}', space=vmem, size = 0x2000, scoped, tag = 'scoped memory for bev_task_van_forward.2']
  #allocation6 [shape = 'u32[2048]{0}', space=vmem, size = 0x2000, scoped, tag = 'scoped memory for bev_task_van_forward.2']
  %s0 = inlined_call_operand.vmem [shape: bf16[48,48], index: 0, kind: input, shape index: {}]
  %s1 = inlined_call_operand.vmem [shape: f32[48,1], index: 1, kind: input, shape index: {}]
  %s2 = inlined_call_operand.vmem [shape: f32[2,128], index: 2, kind: input, shape index: {}]
  %s3 = inlined_call_operand.vmem [shape: f32[24,1], index: 3, kind: input, shape index: {}]
  %s4 = inlined_call_operand.vmem [shape: bf16[32,48], index: 4, kind: input, shape index: {}]
  %s5 = inlined_call_operand.vmem [shape: f32[32,1], index: 5, kind: input, shape index: {}]
  %s6 = inlined_call_operand.vmem [shape: bf16[6,3,128], index: 6, kind: input, shape index: {}]
  %s7 = inlined_call_operand.<no memory space> [shape: bf16[], index: 7, kind: input, shape index: {}]
  %s8 = inlined_call_operand.vmem [shape: f32[1,2], index: 8, kind: output, shape index: {}]
  %s9 = sld [smem:[#allocation0]]
  $region38: #{bev_task_van_forward.2} parent=0
    _
  %s11 = ssub.s32 1, %s9
  %s12 = scalar_select 0, %s11, %s9
  %v13 = vstv %s7
  %v14 = vunpack.i.l.bf16 %v13
  %v16 = vunpack.i.h.bf16 %v13
  $region1: #{bev_task_van_forward.2} parent=0
    #allocation7 [shape = 'u8[512]{0}', space=smem, size = 0x200, scoped, tag = 'output window, operand 0, single buffered']
    #allocation8 [shape = 's32[1]{0}', space=sflag, size = 0x4, scoped, tag = 'scoped memory for bev_task_van_forward.2']
    #allocation9 [shape = 'u8[12288]{0}', space=vmem, size = 0x3000, dematerialized = true, scoped, tag = 'FusionAdapter Buffer %pad_bitcast_fusion.1 = bf16[48,128]{1,0:T(8,128)(2,1)} fusion(%param_6.1, %param_7), kind=kLoop, calls=%fused_computation.clone.clone, metadata={op_name="jit(bev_task_van_forward)/convert_element_type" stack_frame_id=11}']
    %18 = vsyncpa [#allocation8], 0
    // Predicated region
    $region2: #{bev_task_van_forward.2} parent=1 // pred_check
      _
    $region3: #{bev_task_van_forward.2} parent=1 // pred_check_branch
      %20 = sbr.rel (0) target = $region5
    $region4: #{bev_task_van_forward.2} parent=1 // pred_region
      _
    $region5: #{bev_task_van_forward.2} parent=1 // pred_fallthru
      _
    // Predicated region
    $region6: #{bev_task_van_forward.2} parent=1 // pred_check
      _
    $region7: #{bev_task_van_forward.2} parent=1 // pred_check_branch
      %22 = sbr.rel (0) target = $region9
    $region8: #{bev_task_van_forward.2} parent=1 // pred_region
      _
    $region9: #{bev_task_van_forward.2} parent=1 // pred_fallthru
      _
    // Predicated region
    $region10: #{bev_task_van_forward.2} parent=1 // pred_check
      _
    $region11: #{bev_task_van_forward.2} parent=1 // pred_check_branch
      %24 = sbr.rel (0) target = $region13
    $region12: #{bev_task_van_forward.2} parent=1 // pred_region
      _
    $region13: #{bev_task_van_forward.2} parent=1 // pred_fallthru
      _
    // Predicated region
    $region14: #{bev_task_van_forward.2} parent=1 // pred_check
      _
    $region15: #{bev_task_van_forward.2} parent=1 // pred_check_branch
      %26 = sbr.rel (0) target = $region17
    $region16: #{bev_task_van_forward.2} parent=1 // pred_region
      _
    $region17: #{bev_task_van_forward.2} parent=1 // pred_fallthru
      _
    // Predicated region
    $region18: #{bev_task_van_forward.2} parent=1 // pred_check
      _
    $region19: #{bev_task_van_forward.2} parent=1 // pred_check_branch
      %28 = sbr.rel (0) target = $region21
    $region20: #{bev_task_van_forward.2} parent=1 // pred_region
      _
    $region21: #{bev_task_van_forward.2} parent=1 // pred_fallthru
      _
    // Predicated region
    $region22: #{bev_task_van_forward.2} parent=1 // pred_check
      _
    $region23: #{bev_task_van_forward.2} parent=1 // pred_check_branch
      %30 = sbr.rel (0) target = $region25
    $region24: #{bev_task_van_forward.2} parent=1 // pred_region
      _
    $region25: #{bev_task_van_forward.2} parent=1 // pred_fallthru
      _
    // Predicated region
    $region26: #{bev_task_van_forward.2} parent=1 // pred_check
      _
    $region27: #{bev_task_van_forward.2} parent=1 // pred_check_branch
      %32 = sbr.rel (0) target = $region29
    $region28: #{bev_task_van_forward.2} parent=1 // pred_region
      _
    $region29: #{bev_task_van_forward.2} parent=1 // pred_fallthru
      _
    %s34 = sor.u32 15, 7
    %s35 = sand.u32 %s34, 5
    %s36 = sshrl.u32 %s35, 1
    %s37 = sor.u32 %s35, %s36
    %s38 = sand.u32 3, %s37
    %v39 = vld [vmem:[%s6] sm:%s38]
    %v40 = vunpack.c.l.bf16 %v39
    %v41 = vunpack.c.h.bf16 %v39
    %v42 = vlaneseq
    %v43 = vshrl.u32 %v42, 7
    %vm45 = vcmp.lt.s32.totalorder %v43, 3
    %v46 = vsel %vm45, %v40, %v14
    %v47 = vpack.c.bf16 0.0, %v46
    %49 = vst [vmem:[#allocation9] sm:$0xf] %v47
    %s50 = scalar_lea.vmem %s6, 2
    %s52 = sor.u32 15, 7
    %s53 = sand.u32 %s52, 5
    %s54 = sshrl.u32 %s53, 1
    %s55 = sor.u32 %s53, %s54
    %s56 = sand.u32 3, %s55
    %v57 = vld [vmem:[%s50] sm:%s56]
    %v58 = vunpack.c.l.bf16 %v57
    %v59 = vunpack.c.h.bf16 %v57
    %v60 = vlaneseq
    %v61 = vshrl.u32 %v60, 7
    %vm63 = vcmp.lt.s32.totalorder %v61, 3
    %v64 = vsel %vm63, %v58, %v14
    %s65 = scalar_lea.vmem [#allocation9], 4
    %v66 = vpack.c.bf16 0.0, %v64
    %68 = vst [vmem:[%s65] sm:$0xf] %v66
    %s69 = scalar_lea.vmem %s6, 4
    %s71 = sor.u32 15, 7
    %s72 = sand.u32 %s71, 5
    %s73 = sshrl.u32 %s72, 1
    %s74 = sor.u32 %s72, %s73
    %s75 = sand.u32 3, %s74
    %v76 = vld [vmem:[%s69] sm:%s75]
    %v77 = vunpack.c.l.bf16 %v76
    %v78 = vunpack.c.h.bf16 %v76
    %v79 = vlaneseq
    %v80 = vshrl.u32 %v79, 7
    %vm82 = vcmp.lt.s32.totalorder %v80, 3
    %v83 = vsel %vm82, %v77, %v14
    %s84 = scalar_lea.vmem [#allocation9], 8
    %v85 = vpack.c.bf16 0.0, %v83
    %87 = vst [vmem:[%s84] sm:$0xf] %v85
    %s88 = scalar_lea.vmem %s6, 6
    %s90 = sor.u32 15, 7
    %s91 = sand.u32 %s90, 5
    %s92 = sshrl.u32 %s91, 1
    %s93 = sor.u32 %s91, %s92
    %s94 = sand.u32 3, %s93
    %v95 = vld [vmem:[%s88] sm:%s94]
    %v96 = vunpack.c.l.bf16 %v95
    %v97 = vunpack.c.h.bf16 %v95
    %v98 = vlaneseq
    %v99 = vshrl.u32 %v98, 7
    %vm101 = vcmp.lt.s32.totalorder %v99, 3
    %v102 = vsel %vm101, %v96, %v14
    %s103 = scalar_lea.vmem [#allocation9], 12
    %v104 = vpack.c.bf16 0.0, %v102
    %106 = vst [vmem:[%s103] sm:$0xf] %v104
    %s107 = scalar_lea.vmem %s6, 8
    %s109 = sor.u32 15, 7
    %s110 = sand.u32 %s109, 5
    %s111 = sshrl.u32 %s110, 1
    %s112 = sor.u32 %s110, %s111
    %s113 = sand.u32 3, %s112
    %v114 = vld [vmem:[%s107] sm:%s113]
    %v115 = vunpack.c.l.bf16 %v114
    %v116 = vunpack.c.h.bf16 %v114
    %v117 = vlaneseq
    %v118 = vshrl.u32 %v117, 7
    %vm120 = vcmp.lt.s32.totalorder %v118, 3
    %v121 = vsel %vm120, %v115, %v14
    %s122 = scalar_lea.vmem [#allocation9], 16
    %v123 = vpack.c.bf16 0.0, %v121
    %125 = vst [vmem:[%s122] sm:$0xf] %v123
    %s126 = scalar_lea.vmem %s6, 10
    %s128 = sor.u32 15, 7
    %s129 = sand.u32 %s128, 5
    %s130 = sshrl.u32 %s129, 1
    %s131 = sor.u32 %s129, %s130
    %s132 = sand.u32 3, %s131
    %v133 = vld [vmem:[%s126] sm:%s132]
    %v134 = vunpack.c.l.bf16 %v133
    %v135 = vunpack.c.h.bf16 %v133
    %v136 = vlaneseq
    %v137 = vshrl.u32 %v136, 7
    %vm139 = vcmp.lt.s32.totalorder %v137, 3
    %v140 = vsel %vm139, %v134, %v14
    %s141 = scalar_lea.vmem [#allocation9], 20
    %v142 = vpack.c.bf16 0.0, %v140
    %144 = vst [vmem:[%s141] sm:$0xf] %v142
    %v146 = vld [vmem:[%s0] sm:$0xf]
    %v147 = vld [vmem:[%s0 + $0x4] sm:$0xf]
    %v148 = vld [vmem:[%s0 + $0x8] sm:$0xf]
    %v149 = vld [vmem:[%s0 + $0xc] sm:$0xf]
    %v150 = vld [vmem:[%s0 + $0x10] sm:$0xf]
    %v151 = vld [vmem:[%s0 + $0x14] sm:$0xf]
    %v152 = vld [vmem:[#allocation9] sm:$0xf]
    %v153 = vld [vmem:[#allocation9 + $0x4] sm:$0xf]
    %v154 = vld [vmem:[#allocation9 + $0x8] sm:$0xf]
    %v155 = vld [vmem:[#allocation9 + $0xc] sm:$0xf]
    %v156 = vld [vmem:[#allocation9 + $0x10] sm:$0xf]
    %v157 = vld [vmem:[#allocation9 + $0x14] sm:$0xf]
    %v158 = vld [vmem:[%s1] sm:$0xff]
    %v159 = vld [vmem:[%s1 + $0x8] sm:$0xff]
    %v160 = vld [vmem:[%s1 + $0x10] sm:$0xff]
    %v161 = vld [vmem:[%s1 + $0x18] sm:$0xff]
    %v162 = vld [vmem:[%s1 + $0x20] sm:$0xff]
    %v163 = vld [vmem:[%s1 + $0x28] sm:$0xff]
    %165 = vset.pattern.permute.xlu0 0
    %166 = vperm.xlu0 %165, %v158
    %v167 = vpop.permute.xlu0 %166
    %170 = vset.pattern.permute.xlu0 0
    %171 = vperm.xlu0 %170, %v159
    %v172 = vpop.permute.xlu0 %171
    %175 = vset.pattern.permute.xlu0 0
    %176 = vperm.xlu0 %175, %v160
    %v177 = vpop.permute.xlu0 %176
    %180 = vset.pattern.permute.xlu0 0
    %181 = vperm.xlu0 %180, %v161
    %v182 = vpop.permute.xlu0 %181
    %185 = vset.pattern.permute.xlu0 0
    %186 = vperm.xlu0 %185, %v162
    %v187 = vpop.permute.xlu0 %186
    %190 = vset.pattern.permute.xlu0 0
    %191 = vperm.xlu0 %190, %v163
    %v192 = vpop.permute.xlu0 %191
    %v200 = vunpack.c.l.b16 %v146
    %v201 = vunpack.c.l.b16 %v147
    %v202 = vunpack.c.l.b16 %v148
    %v203 = vunpack.c.l.b16 %v149
    %v204 = vunpack.c.l.b16 %v150
    %v205 = vunpack.c.l.b16 %v151
    %v206 = vpack.c.b16 %v201, %v200
    %v207 = vpack.c.b16 %v203, %v202
    %v208 = vpack.c.b16 %v205, %v204
    %v215 = vunpack.c.l.b16 %v152
    %v216 = vunpack.c.l.b16 %v153
    %v217 = vunpack.c.l.b16 %v154
    %v218 = vunpack.c.l.b16 %v155
    %v219 = vunpack.c.l.b16 %v156
    %v220 = vunpack.c.l.b16 %v157
    %v221 = vpack.c.b16 %v216, %v215
    %v222 = vpack.c.b16 %v218, %v217
    %v223 = vpack.c.b16 %v220, %v219
    %vm227 = vcmask 392192
    %v229 = vsel %vm227, %v206, 0
    %v232 = vsel %vm227, %v207, 0
    %v235 = vsel %vm227, %v208, 0
    %237 = vmatprep.subr.bf16.mxu0 0
    %238 = vmatpush1.bf16.msra.mxu0 %v221
    %239 = vmatprep.subr.bf16.mxu0 0
    %240 = vmatpush1.bf16.msra.mxu0 %v222
    %241 = vmatprep.subr.bf16.mxu0 0
    %242 = vmatpush1.bf16.msra.mxu0 %v223
    %243 = vmatprep.subr.bf16.mxu0 0
    %244 = vmatpush1.bf16.msra.mxu0 0
    %245 = vmatprep.subr.bf16.mxu0 0
    %246 = vmatpush1.bf16.msra.mxu0 0
    %247 = vmatprep.subr.bf16.mxu0 0
    %248 = vmatpush1.bf16.msra.mxu0 0
    %249 = vmatprep.subr.bf16.mxu0 0
    %250 = vmatpush1.bf16.msra.mxu0 0
    %251 = vmatprep.subr.bf16.mxu0 0
    %252 = vmatpush1.bf16.msra.mxu0 0
    %253 = vmatprep.subr.bf16.mxu0 0
    %254 = vmatpush1.bf16.msra.mxu0 0
    %255 = vmatprep.subr.bf16.mxu0 0
    %256 = vmatpush1.bf16.msra.mxu0 0
    %257 = vmatprep.subr.bf16.mxu0 0
    %258 = vmatpush1.bf16.msra.mxu0 0
    %259 = vmatprep.subr.bf16.mxu0 0
    %260 = vmatpush1.bf16.msra.mxu0 0
    %261 = vmatprep.subr.bf16.mxu0 0
    %262 = vmatpush1.bf16.msra.mxu0 0
    %263 = vmatprep.subr.bf16.mxu0 0
    %264 = vmatpush1.bf16.msra.mxu0 0
    %265 = vmatprep.subr.bf16.mxu0 0
    %266 = vmatpush1.bf16.msra.mxu0 0
    %267 = vmatprep.subr.bf16.mxu0 0
    %268 = vmatpush1.bf16.msra.mxu0 0
    %269 = vmatprep.mubr.bf16.mxu0 0
    %270 = vmatmul.mubr.bf16.gmra.mrb[0].mxu0 %v229
    %v271 = vpop.f32.mrb[0].mxu0
    %v272 = vadd.f32 %v167, %v271
    %v273 = vpop.f32.mrb[0].mxu0
    %v274 = vpop.f32.mrb[0].mxu0
    %v275 = vadd.f32 %v172, %v274
    %v276 = vpop.f32.mrb[0].mxu0
    %277 = vmatprep.mubr.bf16.mxu0 0
    %278 = vmatmul.mubr.bf16.gmra.mrb[0].mxu0 %v232
    %v279 = vpop.f32.mrb[0].mxu0
    %v280 = vadd.f32 %v177, %v279
    %v281 = vpop.f32.mrb[0].mxu0
    %v282 = vpop.f32.mrb[0].mxu0
    %v283 = vadd.f32 %v182, %v282
    %v284 = vpop.f32.mrb[0].mxu0
    %285 = vmatprep.mubr.bf16.mxu0 0
    %286 = vmatmul.mubr.bf16.gmra.mrb[0].mxu0 %v235
    %v287 = vpop.f32.mrb[0].mxu0
    %v288 = vadd.f32 %v187, %v287
    %v289 = vpop.f32.mrb[0].mxu0
    %v290 = vpop.f32.mrb[0].mxu0
    %v291 = vadd.f32 %v192, %v290
    %v292 = vpop.f32.mrb[0].mxu0
    %293 = vdwg.mxu0
    %v294 = vmax.f32 %v272, 0.0
    %v295 = vmax.f32 %v275, 0.0
    %v296 = vmax.f32 %v280, 0.0
    %v297 = vmax.f32 %v283, 0.0
    %v298 = vmax.f32 %v288, 0.0
    %v299 = vmax.f32 %v291, 0.0
    %v300 = vld [vmem:[%s3] sm:$0xff]
    %v301 = vld [vmem:[%s3 + $0x8] sm:$0xff]
    %v302 = vld [vmem:[%s3 + $0x10] sm:$0xff]
    %v303 = vld [vmem:[%s2] sm:$0x1]
    %vm304 = vcmp.gt.f32.partialorder %v303, 0.0
    %v305 = vsel %vm304, 1, 0
    %v306 = vlaneseq
    %v307 = vshrl.u32 %v306, 7
    %v308 = vsub.s32 0, %v307
    %v309 = vrot.slane %v305, %v308
    %vm310 = vcmp.eq.s32.totalorder %v309, 1
    %312 = vset.pattern.permute.xlu0 0
    %313 = vperm.xlu0 %312, %v300
    %v314 = vpop.permute.xlu0 %313
    %317 = vset.pattern.permute.xlu0 0
    %318 = vperm.xlu0 %317, %v301
    %v319 = vpop.permute.xlu0 %318
    %322 = vset.pattern.permute.xlu0 0
    %323 = vperm.xlu0 %322, %v302
    %v324 = vpop.permute.xlu0 %323
    %v326 = vsel %vm310, %v294, %v314
    %v327 = vsel %vm310, %v295, %v319
    %v328 = vsel %vm310, %v296, %v324
    %v329 = vld [vmem:[%s2 + $0x1] sm:$0x1]
    %vm330 = vcmp.gt.f32.partialorder %v329, 0.0
    %v331 = vsel %vm330, 1, 0
    %v332 = vlaneseq
    %v333 = vshrl.u32 %v332, 7
    %v334 = vsub.s32 0, %v333
    %v335 = vrot.slane %v331, %v334
    %vm336 = vcmp.eq.s32.totalorder %v335, 1
    %v337 = vsel %vm336, %v297, %v314
    %v338 = vsel %vm336, %v298, %v319
    %v339 = vsel %vm336, %v299, %v324
    %v340 = vld [vmem:[%s4] sm:$0xf]
    %v341 = vld [vmem:[%s4 + $0x4] sm:$0xf]
    %v342 = vld [vmem:[%s4 + $0x8] sm:$0xf]
    %v343 = vld [vmem:[%s4 + $0xc] sm:$0xf]
    %v344 = vpack.c.bf16 %v327, %v326
    %v345 = vpack.c.bf16 %v337, %v328
    %v346 = vpack.c.bf16 %v339, %v338
    %v347 = vld [vmem:[%s5] sm:$0xff]
    %v348 = vld [vmem:[%s5 + $0x8] sm:$0xff]
    %v349 = vld [vmem:[%s5 + $0x10] sm:$0xff]
    %v350 = vld [vmem:[%s5 + $0x18] sm:$0xff]
    %352 = vset.pattern.permute.xlu0 0
    %353 = vperm.xlu0 %352, %v347
    %v354 = vpop.permute.xlu0 %353
    %357 = vset.pattern.permute.xlu0 0
    %358 = vperm.xlu0 %357, %v348
    %v359 = vpop.permute.xlu0 %358
    %362 = vset.pattern.permute.xlu0 0
    %363 = vperm.xlu0 %362, %v349
    %v364 = vpop.permute.xlu0 %363
    %367 = vset.pattern.permute.xlu0 0
    %368 = vperm.xlu0 %367, %v350
    %v369 = vpop.permute.xlu0 %368
    %v375 = vunpack.c.l.b16 %v340
    %v376 = vunpack.c.l.b16 %v341
    %v377 = vunpack.c.l.b16 %v342
    %v378 = vunpack.c.l.b16 %v343
    %v379 = vpack.c.b16 %v376, %v375
    %v380 = vpack.c.b16 %v378, %v377
    %v382 = vsel %vm227, %v379, 0
    %v385 = vsel %vm227, %v380, 0
    %387 = vmatprep.subr.bf16.mxu0 0
    %388 = vmatpush1.bf16.msra.mxu0 %v344
    %389 = vmatprep.subr.bf16.mxu0 0
    %390 = vmatpush1.bf16.msra.mxu0 %v345
    %391 = vmatprep.subr.bf16.mxu0 0
    %392 = vmatpush1.bf16.msra.mxu0 %v346
    %393 = vmatprep.subr.bf16.mxu0 0
    %394 = vmatpush1.bf16.msra.mxu0 0
    %395 = vmatprep.subr.bf16.mxu0 0
    %396 = vmatpush1.bf16.msra.mxu0 0
    %397 = vmatprep.subr.bf16.mxu0 0
    %398 = vmatpush1.bf16.msra.mxu0 0
    %399 = vmatprep.subr.bf16.mxu0 0
    %400 = vmatpush1.bf16.msra.mxu0 0
    %401 = vmatprep.subr.bf16.mxu0 0
    %402 = vmatpush1.bf16.msra.mxu0 0
    %403 = vmatprep.subr.bf16.mxu0 0
    %404 = vmatpush1.bf16.msra.mxu0 0
    %405 = vmatprep.subr.bf16.mxu0 0
    %406 = vmatpush1.bf16.msra.mxu0 0
    %407 = vmatprep.subr.bf16.mxu0 0
    %408 = vmatpush1.bf16.msra.mxu0 0
    %409 = vmatprep.subr.bf16.mxu0 0
    %410 = vmatpush1.bf16.msra.mxu0 0
    %411 = vmatprep.subr.bf16.mxu0 0
    %412 = vmatpush1.bf16.msra.mxu0 0
    %413 = vmatprep.subr.bf16.mxu0 0
    %414 = vmatpush1.bf16.msra.mxu0 0
    %415 = vmatprep.subr.bf16.mxu0 0
    %416 = vmatpush1.bf16.msra.mxu0 0
    %417 = vmatprep.subr.bf16.mxu0 0
    %418 = vmatpush1.bf16.msra.mxu0 0
    %419 = vmatprep.mubr.bf16.mxu0 0
    %420 = vmatmul.mubr.bf16.gmra.mrb[0].mxu0 %v382
    %v421 = vpop.f32.mrb[0].mxu0
    %v422 = vadd.f32 %v354, %v421
    %v423 = vpop.f32.mrb[0].mxu0
    %v424 = vpop.f32.mrb[0].mxu0
    %v425 = vadd.f32 %v359, %v424
    %v426 = vpop.f32.mrb[0].mxu0
    %427 = vmatprep.mubr.bf16.mxu0 0
    %428 = vmatmul.mubr.bf16.gmra.mrb[0].mxu0 %v385
    %v429 = vpop.f32.mrb[0].mxu0
    %v430 = vadd.f32 %v364, %v429
    %v431 = vpop.f32.mrb[0].mxu0
    %v432 = vpop.f32.mrb[0].mxu0
    %v433 = vadd.f32 %v369, %v432
    %v434 = vpop.f32.mrb[0].mxu0
    %435 = vdwg.mxu0
    %v436 = vmax.f32 %v422, 0.0
    %v437 = vmax.f32 %v425, 0.0
    %v438 = vmax.f32 %v430, 0.0
    %v439 = vmax.f32 %v433, 0.0
    %v440 = vmul.f32 %v436, %v436
    %v441 = vmul.f32 %v437, %v437
    %v442 = vmul.f32 %v438, %v438
    %v443 = vmul.f32 %v439, %v439
    %444 = vadd.xlane.f32.xlu0 %v440
    %v445 = vpop.xlane.xlu0 %444
    %446 = vadd.xlane.f32.xlu0 %v441
    %v447 = vpop.xlane.xlu0 %446
    %448 = vadd.xlane.f32.xlu0 %v442
    %v449 = vpop.xlane.xlu0 %448
    %450 = vadd.xlane.f32.xlu0 %v443
    %v451 = vpop.xlane.xlu0 %450
    %vm452 = vcmask 7168
    %v453 = vsel %vm452, %v445, 0.0
    %v454 = vsel %vm452, %v447, 0.0
    %v455 = vadd.f32 %v453, %v454
    %456 = vadd.xlane.f32.xlu0 %v455
    %v457 = vpop.xlane.xlu0 %456
    %v458 = vrot.slane %v457, 4
    %v459 = vadd.f32 %v457, %v458
    %v460 = vrot.slane %v459, 2
    %v461 = vadd.f32 %v459, %v460
    %v462 = vrot.slane %v461, 1
    %v463 = vadd.f32 %v461, %v462
    %s464 = vtos %v463
    %s465 = smul.f32 %s464, 0.00048828125
    %s466 = scalar_lea.smem [#allocation7], 0
    %467 = sst [smem:[%s466]] %s465
    %v468 = vsel %vm452, %v449, 0.0
    %v469 = vsel %vm452, %v451, 0.0
    %v470 = vadd.f32 %v468, %v469
    %471 = vadd.xlane.f32.xlu0 %v470
    %v472 = vpop.xlane.xlu0 %471
    %v473 = vrot.slane %v472, 4
    %v474 = vadd.f32 %v472, %v473
    %v475 = vrot.slane %v474, 2
    %v476 = vadd.f32 %v474, %v475
    %v477 = vrot.slane %v476, 1
    %v478 = vadd.f32 %v476, %v477
    %s479 = vtos %v478
    %s480 = smul.f32 %s479, 0.00048828125
    %s481 = scalar_lea.smem [#allocation7], 1
    %482 = sst [smem:[%s481]] %s480
    // Predicated region
    $region30: #{bev_task_van_forward.2} parent=1 // pred_check
      _
    $region31: #{bev_task_van_forward.2} parent=1 // pred_check_branch
      %484 = sbr.rel (0) target = $region33
    $region32: #{bev_task_van_forward.2} parent=1 // pred_region
      %s486 = ssub.s32 16, 16
      %487 = vsyncadd [#allocation8], %s486
      %s489 = sshll.u32 %s8, 4
      %s490 = int_to_ptr.vmem [resolvable:$true] %s489
      %492 = dma.smem_to_vmem [#allocation7], 16, %s490, [#allocation8]
    $region33: #{bev_task_van_forward.2} parent=1 // pred_fallthru
      _
    // Predicated region
    $region34: #{bev_task_van_forward.2} parent=1 // pred_check
      _
    $region35: #{bev_task_van_forward.2} parent=1 // pred_check_branch
      %494 = sbr.rel (0) target = $region37
    $region36: #{bev_task_van_forward.2} parent=1 // pred_region
      %495 = dma.done [#allocation8], 16
    $region37: #{bev_task_van_forward.2} parent=1 // pred_fallthru
      _
    %496 = sfence
    %497 = vsyncpa [#allocation8], 1

</llo_original>
